<compile_context>
chip_gen: v7x
topology: tpu7x:2x2x1
jax: 0.10.0
libtpu: 0.0.40
codegen_flags: <defaults>
</compile_context>

<pallas_src>
import jax
import jax.numpy as jnp
from jax.experimental import pallas as pl
from jax.experimental.pallas import tpu as pltpu


def build_3d_grid(resolution):
    """JAX port of the PyTorch build_3d_grid (returns [T, H, W, 6])."""
    ranges = [jnp.linspace(0.0, 1.0, num=res) for res in resolution]
    mesh = jnp.meshgrid(*ranges, indexing="ij")           # torch default is 'ij'
    grid = jnp.stack(mesh, axis=-1)                       # [T, H, W, 3]
    grid = grid.reshape(resolution[0], resolution[1], resolution[2], -1)
    return jnp.concatenate([grid, 1.0 - grid], axis=-1)   # [T, H, W, 6]


def _soft_pos_add_kernel(emb_ref, x_ref, o_ref):
    # emb_ref: (tile_m, LANE)      -- positional embedding tile (same dtype as x)
    # x_ref / o_ref: (B, tile_m, LANE)
    # Pure VPU broadcast-add; no MXU, no masked stores (LANE % 128 == 0).
    o_ref[...] = x_ref[...] + emb_ref[...][None, :, :]


def _gcd(a, b):
    while b:
        a, b = b, a % b
    return a


def _round_up(x, m):
    return ((x + m - 1) // m) * m


def _choose_tile_m(m_rows, row_bytes, target_block_bytes=4 << 20):
    """Largest multiple-of-8 tile with block bytes <= target, >=2 grid steps."""
    tile = max(8, (target_block_bytes // max(row_bytes, 1)) // 8 * 8)
    if m_rows > 16:
        # Keep at least two grid steps so v7x's two TensorCores both get work.
        tile = min(tile, max(8, _round_up(-(-m_rows // 2), 8)))
    tile = min(tile, _round_up(m_rows, 8))
    return tile


def soft_position_embed_3d(inputs, grid, weight, bias):
    """inputs: [B, T, H, W, C], grid: [T, H, W, 6], weight: [6, C], bias: [C]."""
    B, T, H, W, C = inputs.shape
    N = T * H * W

    # --- Hoisted tiny matmul: emb = grid @ W + b (per-forward constant). -----
    emb = (grid.reshape(N, 6).astype(jnp.float32) @ weight.astype(jnp.float32)
           + bias.astype(jnp.float32)).astype(inputs.dtype)        # [N, C]

    # --- Lane-dense folding: group k positions so the last dim is a multiple
    #     of 128 (k = 1 if C already is). ------------------------------------
    k = 128 // _gcd(C, 128)
    lane = k * C

    m_rows = -(-N // k)                                   # ceil(N / k)
    itemsize = jnp.dtype(inputs.dtype).itemsize
    row_bytes = B * lane * itemsize                       # bytes per folded row of x
    tile_m = _choose_tile_m(m_rows, row_bytes)
    m_pad = _round_up(m_rows, tile_m)
    n_pad = m_pad * k

    x_flat = inputs.reshape(B, N, C)
    if n_pad != N:
        x_flat = jnp.pad(x_flat, ((0, 0), (0, n_pad - N), (0, 0)))
        emb = jnp.pad(emb, ((0, n_pad - N), (0, 0)))

    x3 = x_flat.reshape(B, m_pad, lane)                   # lane-dense view
    emb2 = emb.reshape(m_pad, lane)

    num_steps = m_pad // tile_m

    # Double-buffered footprint: 2*(x + out) + 2*emb blocks, plus slack.
    block_bytes = B * tile_m * lane * itemsize
    emb_block_bytes = tile_m * lane * itemsize
    vmem_need = 2 * (2 * block_bytes + emb_block_bytes) + (4 << 20)
    vmem_limit = min(64 << 20, max(vmem_need, 16 << 20))  # fits v7x's 64 MiB VMEM

    out3 = pl.pallas_call(
        _soft_pos_add_kernel,
        out_shape=jax.ShapeDtypeStruct((B, m_pad, lane), inputs.dtype),
        grid_spec=pltpu.PrefetchScalarGridSpec(
            num_scalar_prefetch=0,
            grid=(num_steps,),
            in_specs=[
                pl.BlockSpec((tile_m, lane), lambda j: (j, 0)),        # emb tile
                pl.BlockSpec((B, tile_m, lane), lambda j: (0, j, 0)),  # x tile
            ],
            out_specs=pl.BlockSpec((B, tile_m, lane), lambda j: (0, j, 0)),
        ),
        compiler_params=pltpu.CompilerParams(
            dimension_semantics=("parallel",),
            vmem_limit_bytes=vmem_limit,
        ),
    )(emb2, x3)

    out = out3.reshape(B, n_pad, C)
    if n_pad != N:
        out = out[:, :N, :]
    return out.reshape(B, T, H, W, C)


if __name__ == "__main__":
    # Small deterministic config (matches the module's expected layout).
    hidden_size = 32
    resolution = (4, 8, 8)   # (T, H, W) -> N = 256
    batch = 2

    key = jax.random.PRNGKey(0)
    k_x, k_w, k_b = jax.random.split(key, 3)

    inputs = jax.random.normal(
        k_x, (batch, *resolution, hidden_size), dtype=jnp.float32)
    # Deterministic "Linear(6, hidden_size)" parameters (synthetic init).
    weight = jax.random.normal(k_w, (6, hidden_size), dtype=jnp.float32) * 0.1
    bias = jax.random.normal(k_b, (hidden_size,), dtype=jnp.float32) * 0.1

    grid = build_3d_grid(resolution)

    out = soft_position_embed_3d(inputs, grid, weight, bias)
    jax.block_until_ready(out)

    # Cross-check against plain-JAX reference.
    ref = inputs + (grid.reshape(-1, 6) @ weight + bias).reshape(
        1, *resolution, hidden_size)
    assert jnp.allclose(out, ref, atol=1e-5, rtol=1e-5), "mismatch vs reference"

    print("KERNEL_OK")
</pallas_src>

<mosaic_0001>
module attributes {stable_mosaic.version = 11 : i64} {
  func.func @_soft_pos_add_kernel(%arg0: i32, %arg1: memref<32x128xf32, #tpu.memory_space<vmem>>, %arg2: memref<2x32x128xf32, #tpu.memory_space<vmem>>, %arg3: memref<2x32x128xf32, #tpu.memory_space<vmem>>) attributes {dimension_semantics = [#tpu.dimension_semantics<parallel>], iteration_bounds = array<i64: 2>, scalar_prefetch = 0 : i64, scratch_operands = 0 : i64, tpu.core_type = #tpu.core_type<tc>, window_params = [{transform_indices = @transform_0, window_bounds = array<i64: 32, 128>}, {transform_indices = @transform_1, window_bounds = array<i64: 2, 32, 128>}, {transform_indices = @transform_2, window_bounds = array<i64: 2, 32, 128>}]} {
    %c0 = arith.constant 0 : index
    %c0_0 = arith.constant 0 : index
    %c0_1 = arith.constant 0 : index
    %0 = vector.load %arg2[%c0, %c0_0, %c0_1] : memref<2x32x128xf32, #tpu.memory_space<vmem>>, vector<2x32x128xf32>
    %c0_2 = arith.constant 0 : index
    %c0_3 = arith.constant 0 : index
    %1 = vector.load %arg1[%c0_2, %c0_3] : memref<32x128xf32, #tpu.memory_space<vmem>>, vector<32x128xf32>
    %2 = vector.shape_cast %1 : vector<32x128xf32> to vector<1x32x128xf32>
    %3 = vector.broadcast %2 : vector<1x32x128xf32> to vector<2x32x128xf32>
    %4 = arith.addf %0, %3 : vector<2x32x128xf32>
    %c0_4 = arith.constant 0 : index
    %c0_5 = arith.constant 0 : index
    %c0_6 = arith.constant 0 : index
    %5 = vector.load %arg3[%c0_4, %c0_5, %c0_6] : memref<2x32x128xf32, #tpu.memory_space<vmem>>, vector<2x32x128xf32>
    tpu.vector_store %arg3[%c0_4, %c0_5, %c0_6], %4 {strides = array<i32>} : memref<2x32x128xf32, #tpu.memory_space<vmem>>, vector<2x32x128xf32>,
    return
  }
  func.func @transform_0(%arg0: i32) -> (i32, i32) {
    %c0_i32 = arith.constant 0 : i32
    %c0_i32_0 = arith.constant 0 : i32
    return %arg0, %c0_i32 : i32, i32
  }
  func.func @transform_1(%arg0: i32) -> (i32, i32, i32) {
    %c0_i32 = arith.constant 0 : i32
    %c0_i32_0 = arith.constant 0 : i32
    %c0_i32_1 = arith.constant 0 : i32
    return %c0_i32, %arg0, %c0_i32_0 : i32, i32, i32
  }
  func.func @transform_2(%arg0: i32) -> (i32, i32, i32) {
    %c0_i32 = arith.constant 0 : i32
    %c0_i32_0 = arith.constant 0 : i32
    %c0_i32_1 = arith.constant 0 : i32
    return %c0_i32, %arg0, %c0_i32_0 : i32, i32, i32
  }
}

</mosaic_0001>

<llo_original>
// kernel: tpu_custom_call.1
$region0: #{tpu_custom_call.1}
  #allocation0 [shape = 'u32[]', space=smem, size = 0x4, offset = 0x4, fixed_abs, tag = 'smem constant byte address 0x4 - core index']
  #allocation1 [shape = 'u32[144,128]{1,0:T(1,128)}', space=vmem, size = 0x12000, scoped, tag = 'internal scratch']
  #allocation8 [shape = 's32[]', space=sflag, size = 0x4, offset = 0, fixed_abs, tag = 'sflag constant byte address 0x0 - dummy sync flag']
  #allocation10 [shape = 's32[]', space=sflag, size = 0x4, offset = 0, fixed_abs, tag = 'sflag constant byte address 0x0 - dummy sync flag']
  %s0 = inlined_call_operand.hbm [shape: f32[64,128], index: 0, kind: input, shape index: {}]
  %s1 = inlined_call_operand.hbm [shape: f32[2,64,128], index: 1, kind: input, shape index: {}]
  %s2 = inlined_call_operand.hbm [shape: f32[2,64,128], index: 2, kind: output, shape index: {}]
  %s3 = sld [smem:[#allocation0]]
  $region49: #{tpu_custom_call.1} parent=0
    _
  %s5 = ssub.s32 1, %s3
  %s6 = scalar_select 0, %s5, %s3
  $region1: #{tpu_custom_call.1} parent=0
    #allocation2 [shape = 'u8[32768]{0}', space=vmem, size = 0x8000, scoped, tag = 'input window, operand 0']
    #allocation3 [shape = 's32[2]{0}', space=sflag, size = 0x8, scoped, tag = 'scoped memory for tpu_custom_call.1']
    #allocation4 [shape = 's32[2]{0}', space=sflag, size = 0x8, scoped, tag = 'scoped memory for tpu_custom_call.1']
    #allocation5 [shape = 'u8[65536]{0}', space=vmem, size = 0x10000, scoped, tag = 'input window, operand 1']
    #allocation6 [shape = 's32[2]{0}', space=sflag, size = 0x8, scoped, tag = 'scoped memory for tpu_custom_call.1']
    #allocation7 [shape = 'u8[65536]{0}', space=vmem, size = 0x10000, scoped, tag = 'output window, operand 0']
    %7 = vsyncpa [#allocation3], 0
    %s8 = scalar_lea.sflag [#allocation3], 1
    %9 = vsyncpa %s8, 0
    %10 = vsyncpa [#allocation6], 0
    %s11 = scalar_lea.sflag [#allocation6], 1
    %12 = vsyncpa %s11, 0
    %13 = vsyncpa [#allocation4], 0
    %s14 = scalar_lea.sflag [#allocation4], 1
    %15 = vsyncpa %s14, 0
    loop: start=0, step=1, limit=4
    $region2: #{tpu_custom_call.1} parent=1 // loop_pre_header
      _
    $region3: #{tpu_custom_call.1} parent=1 // loop_header
      %s17 = sphi 0, %s21
      %p18 = scmp.ge.s32.totalorder %s17, 4
      %s27 = sphi 0, %s29
      %s30 = sphi 0, %s27
      %s31 = sphi 0, %s30
      %s47 = sphi 0, %s31
      %s53 = sphi 0, %s55
      %s56 = sphi 0, %s53
      %s57 = sphi 0, %s56
      %s73 = sphi 0, %s57
      %s79 = sphi 0, %s81
      %s82 = sphi 0, %s79
      %s83 = sphi 0, %s82
      %s99 = sphi 0, %s83
    $region4: #{tpu_custom_call.1} parent=1 // loop_header_branch
      %20 = sbr.rel (%p18) target = $region8
    $region5: #{tpu_custom_call.1} parent=1 // loop_body
      %s22 = ssub.s32 %s17, 1
      %s23 = ssub.s32 %s17, 2
      %s24 = sadd.s32 %s17, 1
      %s25 = ssub.s32 %s17, %s24
      %p26 = scmp.eq.s32.totalorder %s25, 0
      %s28 = sadd.s32 %s27, 1
      %s29 = scalar_select %p26, %s27, %s28
      %p32 = pneg %p26
      %p33 = scmp.eq.s32.totalorder %s17, 1
      %p34 = por %p32, %p33
      %p35 = scmp.ne.s32.totalorder %s27, %s30
      %p36 = scmp.eq.s32.totalorder %s17, 0
      %p37 = por %p35, %p36
      %p38 = scmp.ne.s32.totalorder %s27, %s30
      %p39 = scmp.eq.s32.totalorder %s22, 1
      %p40 = por %p38, %p39
      %p41 = scmp.ne.s32.totalorder %s30, %s31
      %p42 = scmp.eq.s32.totalorder %s22, 0
      %p43 = por %p41, %p42
      %p44 = scmp.ne.s32.totalorder %s30, %s31
      %p45 = scmp.eq.s32.totalorder %s23, 1
      %p46 = por %p44, %p45
      %p48 = scmp.ne.s32.totalorder %s31, %s47
      %p49 = scmp.eq.s32.totalorder %s23, 0
      %p50 = por %p48, %p49
      %s51 = ssub.s32 %s17, %s24
      %p52 = scmp.eq.s32.totalorder %s51, 0
      %s54 = sadd.s32 %s53, 1
      %s55 = scalar_select %p52, %s53, %s54
      %p58 = pneg %p52
      %p59 = scmp.eq.s32.totalorder %s17, 1
      %p60 = por %p58, %p59
      %p61 = scmp.ne.s32.totalorder %s53, %s56
      %p62 = scmp.eq.s32.totalorder %s17, 0
      %p63 = por %p61, %p62
      %p64 = scmp.ne.s32.totalorder %s53, %s56
      %p65 = scmp.eq.s32.totalorder %s22, 1
      %p66 = por %p64, %p65
      %p67 = scmp.ne.s32.totalorder %s56, %s57
      %p68 = scmp.eq.s32.totalorder %s22, 0
      %p69 = por %p67, %p68
      %p70 = scmp.ne.s32.totalorder %s56, %s57
      %p71 = scmp.eq.s32.totalorder %s23, 1
      %p72 = por %p70, %p71
      %p74 = scmp.ne.s32.totalorder %s57, %s73
      %p75 = scmp.eq.s32.totalorder %s23, 0
      %p76 = por %p74, %p75
      %s77 = ssub.s32 %s17, %s24
      %p78 = scmp.eq.s32.totalorder %s77, 0
      %s80 = sadd.s32 %s79, 1
      %s81 = scalar_select %p78, %s79, %s80
      %p84 = pneg %p78
      %p85 = scmp.eq.s32.totalorder %s17, 1
      %p86 = por %p84, %p85
      %p87 = scmp.ne.s32.totalorder %s79, %s82
      %p88 = scmp.eq.s32.totalorder %s17, 0
      %p89 = por %p87, %p88
      %p90 = scmp.ne.s32.totalorder %s79, %s82
      %p91 = scmp.eq.s32.totalorder %s22, 1
      %p92 = por %p90, %p91
      %p93 = scmp.ne.s32.totalorder %s82, %s83
      %p94 = scmp.eq.s32.totalorder %s22, 0
      %p95 = por %p93, %p94
      %p96 = scmp.ne.s32.totalorder %s82, %s83
      %p97 = scmp.eq.s32.totalorder %s23, 1
      %p98 = por %p96, %p97
      %p100 = scmp.ne.s32.totalorder %s83, %s99
      %p101 = scmp.eq.s32.totalorder %s23, 0
      %p102 = por %p100, %p101
      %p103 = scmp.le.s32.totalorder 1, %s17
      %p104 = scmp.lt.s32.totalorder %s17, 3
      %p105 = pnand %p103, %p104
      %p106 = pneg %p105
      // Predicated region
      $region9: #{tpu_custom_call.1} parent=5 // pred_check
        _
      $region10: #{tpu_custom_call.1} parent=5 // pred_check_branch
        %108 = sbr.rel (%p105) target = $region12
      $region11: #{tpu_custom_call.1} parent=5 // pred_region
        %s109 = ssub.s32 %s17, 1
      $region12: #{tpu_custom_call.1} parent=5 // pred_fallthru
        _
      %p110 = scmp.lt.s32.totalorder %s17, 2
      // Predicated region
      $region13: #{tpu_custom_call.1} parent=5 // pred_check
        %p111 = pneg %p110
      $region14: #{tpu_custom_call.1} parent=5 // pred_check_branch
        %113 = sbr.rel (%p111) target = $region16
      $region15: #{tpu_custom_call.1} parent=5 // pred_region
        // Predicated region
        $region17: #{tpu_custom_call.1} parent=15 // pred_check
          %p114 = pneg %p37
        $region18: #{tpu_custom_call.1} parent=15 // pred_check_branch
          %116 = sbr.rel (%p114) target = $region20
        $region19: #{tpu_custom_call.1} parent=15 // pred_region
          %s117 = sand.u32 %s27, 1
          %s118 = scalar_lea.sflag [#allocation3], %s117
          %s119 = sand.u32 %s27, 1
          %s120 = smul.addr %s119, 32
          %s121 = scalar_lea.vmem [#allocation2], %s120
          %s122 = smul.u32 4, %s17
          %s124 = ssub.s32 512, 512
          %125 = vsyncadd %s118, %s124
          %s126 = smul.addr %s122, 128
          %s127 = scalar_lea.hbm %s0, %s126
          %s128 = sshll.u32 %s121, 4
          %s129 = int_to_ptr.vmem [resolvable:$true] %s128
          %134 = dma.hbm_to_vmem [thread:$0]  %s127, 512, %s129, %s118, 128, 128, 8
        $region20: #{tpu_custom_call.1} parent=15 // pred_fallthru
          _
        // Predicated region
        $region21: #{tpu_custom_call.1} parent=15 // pred_check
          %p135 = pneg %p63
        $region22: #{tpu_custom_call.1} parent=15 // pred_check_branch
          %137 = sbr.rel (%p135) target = $region24
        $region23: #{tpu_custom_call.1} parent=15 // pred_region
          #allocation9 [shape = 'u32[6]{0}', space=smem, size = 0x18, scoped, tag = 'DMA stride descriptor']
          %s138 = sand.u32 %s53, 1
          %s139 = scalar_lea.sflag [#allocation6], %s138
          %s140 = sand.u32 %s53, 1
          %s141 = smul.addr %s140, 64
          %s142 = scalar_lea.vmem [#allocation5], %s141
          %s143 = smul.u32 4, %s17
          %s145 = ssub.s32 1024, 1024
          %146 = vsyncadd %s139, %s145
          %s147 = smul.addr %s143, 128
          %s148 = scalar_lea.hbm %s1, %s147
          %s150 = sshll.u32 1, 14
          %s151 = sxor.u32 4294967295, %s150
          %s153 = sld [smem:[#allocation0]]
          %s154 = sadd.s32 2, %s153
          %s156 = sshll.u32 7, 26
          %s157 = sxor.u32 4294967295, %s156
          %s158 = sand.u32 0, %s157
          %s159 = sshll.u32 %s154, 26
          %s160 = sor.u32 %s158, %s159
          %s161 = sshll.u32 %s142, 4
          %s162 = int_to_ptr.vmem [resolvable:$true] %s161
          %168 = sst [smem:[#allocation9]] 1024
          %s169 = scalar_lea.smem [#allocation9], 1
          %170 = sst [smem:[%s169]] 512
          %s171 = scalar_lea.smem [#allocation9], 2
          %172 = sst [smem:[%s171]] 4
          %s173 = scalar_lea.smem [#allocation9], 3
          %174 = sst [smem:[%s173]] 128
          %s175 = scalar_lea.smem [#allocation9], 4
          %176 = sst [smem:[%s175]] 128
          %s177 = scalar_lea.smem [#allocation9], 5
          %178 = sst [smem:[%s177]] 8
          %180 = dma.general %s148, 1024, %s162, %s139, [#allocation8], [#allocation9], %s160, 0
        $region24: #{tpu_custom_call.1} parent=15 // pred_fallthru
          _
      $region16: #{tpu_custom_call.1} parent=5 // pred_fallthru
        _
      %p181 = scmp.le.s32.totalorder 1, %s17
      %p182 = scmp.lt.s32.totalorder %s17, 3
      %p183 = pnand %p181, %p182
      %p184 = pneg %p183
      // Predicated region
      $region25: #{tpu_custom_call.1} parent=5 // pred_check
        _
      $region26: #{tpu_custom_call.1} parent=5 // pred_check_branch
        %186 = sbr.rel (%p183) target = $region28
      $region27: #{tpu_custom_call.1} parent=5 // pred_region
        %s187 = ssub.s32 %s17, 1
        %s188 = sand.u32 %s30, 1
        %s189 = scalar_lea.sflag [#allocation3], %s188
        %s190 = sand.u32 %s30, 1
        %s191 = smul.addr %s190, 32
        %s192 = scalar_lea.vmem [#allocation2], %s191
        // Predicated region
        $region29: #{tpu_custom_call.1} parent=27 // pred_check
          %p193 = pneg %p43
        $region30: #{tpu_custom_call.1} parent=27 // pred_check_branch
          %195 = sbr.rel (%p193) target = $region32
        $region31: #{tpu_custom_call.1} parent=27 // pred_region
          %196 = dma.done %s189, 512
        $region32: #{tpu_custom_call.1} parent=27 // pred_fallthru
          _
        %s197 = sand.u32 %s56, 1
        %s198 = scalar_lea.sflag [#allocation6], %s197
        %s199 = sand.u32 %s56, 1
        %s200 = smul.addr %s199, 64
        %s201 = scalar_lea.vmem [#allocation5], %s200
        // Predicated region
        $region33: #{tpu_custom_call.1} parent=27 // pred_check
          %p202 = pneg %p69
        $region34: #{tpu_custom_call.1} parent=27 // pred_check_branch
          %204 = sbr.rel (%p202) target = $region36
        $region35: #{tpu_custom_call.1} parent=27 // pred_region
          %205 = dma.done %s198, 1024
        $region36: #{tpu_custom_call.1} parent=27 // pred_fallthru
          _
        %s206 = sand.u32 %s30, 1
        %s207 = scalar_lea.sflag [#allocation3], %s206
        %s208 = sand.u32 %s30, 1
        %s209 = smul.addr %s208, 32
        %s210 = scalar_lea.vmem [#allocation2], %s209
        %p211 = pneg %p43
        %p212 = pneg %p40
        %s213 = sand.u32 %s56, 1
        %s214 = scalar_lea.sflag [#allocation6], %s213
        %s215 = sand.u32 %s56, 1
        %s216 = smul.addr %s215, 64
        %s217 = scalar_lea.vmem [#allocation5], %s216
        %p218 = pneg %p69
        %p219 = pneg %p66
        %p220 = pneg %p95
        %p221 = pneg %p92
        %s222 = sand.u32 %s82, 1
        %s223 = scalar_lea.sflag [#allocation4], %s222
        %s224 = sand.u32 %s82, 1
        %s225 = smul.addr %s224, 64
        %s226 = scalar_lea.vmem [#allocation7], %s225
        %s227 = smul.u32 4, %s22
        %s228 = smul.u32 4, %s22
        %s229 = smul.u32 4, %s22
        %v230 = vld [vmem:[%s201] sm:$0xff]
        %v231 = vld [vmem:[%s201 + $0x8] sm:$0xff]
        %v232 = vld [vmem:[%s201 + $0x10] sm:$0xff]
        %v233 = vld [vmem:[%s201 + $0x18] sm:$0xff]
        %v234 = vld [vmem:[%s201 + $0x20] sm:$0xff]
        %v235 = vld [vmem:[%s201 + $0x28] sm:$0xff]
        %v236 = vld [vmem:[%s201 + $0x30] sm:$0xff]
        %v237 = vld [vmem:[%s201 + $0x38] sm:$0xff]
        %v238 = vld [vmem:[%s192] sm:$0xff]
        %v239 = vld [vmem:[%s192 + $0x8] sm:$0xff]
        %v240 = vld [vmem:[%s192 + $0x10] sm:$0xff]
        %v241 = vld [vmem:[%s192 + $0x18] sm:$0xff]
        %v242 = vadd.f32 %v230, %v238
        %v243 = vadd.f32 %v231, %v239
        %v244 = vadd.f32 %v232, %v240
        %v245 = vadd.f32 %v233, %v241
        %v246 = vadd.f32 %v234, %v238
        %v247 = vadd.f32 %v235, %v239
        %v248 = vadd.f32 %v236, %v240
        %v249 = vadd.f32 %v237, %v241
        %250 = vst [vmem:[%s226] sm:$0xff] %v242
        %251 = vst [vmem:[%s226 + $0x8] sm:$0xff] %v243
        %252 = vst [vmem:[%s226 + $0x10] sm:$0xff] %v244
        %253 = vst [vmem:[%s226 + $0x18] sm:$0xff] %v245
        %254 = vst [vmem:[%s226 + $0x20] sm:$0xff] %v246
        %255 = vst [vmem:[%s226 + $0x28] sm:$0xff] %v247
        %256 = vst [vmem:[%s226 + $0x30] sm:$0xff] %v248
        %257 = vst [vmem:[%s226 + $0x38] sm:$0xff] %v249
        %s258 = sand.u32 %s82, 1
        %s259 = scalar_lea.sflag [#allocation4], %s258
        %s260 = sand.u32 %s82, 1
        %s261 = smul.addr %s260, 64
        %s262 = scalar_lea.vmem [#allocation7], %s261
        // Predicated region
        $region37: #{tpu_custom_call.1} parent=27 // pred_check
          %p263 = pneg %p92
        $region38: #{tpu_custom_call.1} parent=27 // pred_check_branch
          %265 = sbr.rel (%p263) target = $region40
        $region39: #{tpu_custom_call.1} parent=27 // pred_region
          #allocation11 [shape = 'u32[6]{0}', space=smem, size = 0x18, scoped, tag = 'DMA stride descriptor']
          %s266 = smul.u32 4, %s22
          %s268 = ssub.s32 1024, 1024
          %269 = vsyncadd %s259, %s268
          %s270 = smul.addr %s266, 128
          %s271 = scalar_lea.hbm %s2, %s270
          %s273 = sshll.u32 1, 14
          %s274 = sxor.u32 4294967295, %s273
          %s277 = sshll.u32 7, 18
          %s278 = sxor.u32 4294967295, %s277
          %s279 = sand.u32 0, %s278
          %s281 = sor.u32 %s279, 0
          %s283 = sshll.u32 3, 24
          %s284 = sxor.u32 4294967295, %s283
          %s285 = sand.u32 %s281, %s284
          %s287 = sor.u32 %s285, 0
          %s288 = sshll.u32 %s262, 4
          %s289 = int_to_ptr.vmem [resolvable:$true] %s288
          %295 = sst [smem:[#allocation11]] 512
          %s296 = scalar_lea.smem [#allocation11], 1
          %297 = sst [smem:[%s296]] 1024
          %s298 = scalar_lea.smem [#allocation11], 2
          %299 = sst [smem:[%s298]] 4
          %s300 = scalar_lea.smem [#allocation11], 3
          %301 = sst [smem:[%s300]] 128
          %s302 = scalar_lea.smem [#allocation11], 4
          %303 = sst [smem:[%s302]] 128
          %s304 = scalar_lea.smem [#allocation11], 5
          %305 = sst [smem:[%s304]] 8
          %307 = dma.general %s289, 1024, %s271, %s259, [#allocation10], [#allocation11], %s287, 0
        $region40: #{tpu_custom_call.1} parent=27 // pred_fallthru
          _
      $region28: #{tpu_custom_call.1} parent=5 // pred_fallthru
        _
      %p308 = scmp.le.s32.totalorder 2, %s17
      // Predicated region
      $region41: #{tpu_custom_call.1} parent=5 // pred_check
        %p309 = pneg %p308
      $region42: #{tpu_custom_call.1} parent=5 // pred_check_branch
        %311 = sbr.rel (%p309) target = $region44
      $region43: #{tpu_custom_call.1} parent=5 // pred_region
        %s312 = ssub.s32 %s17, 2
        // Predicated region
        $region45: #{tpu_custom_call.1} parent=43 // pred_check
          %p313 = pneg %p98
        $region46: #{tpu_custom_call.1} parent=43 // pred_check_branch
          %315 = sbr.rel (%p313) target = $region48
        $region47: #{tpu_custom_call.1} parent=43 // pred_region
          %s316 = sand.u32 %s83, 1
          %s317 = scalar_lea.sflag [#allocation4], %s316
          %s318 = sand.u32 %s83, 1
          %s319 = smul.addr %s318, 64
          %s320 = scalar_lea.vmem [#allocation7], %s319
          %321 = dma.done %s317, 1024
        $region48: #{tpu_custom_call.1} parent=43 // pred_fallthru
          _
      $region44: #{tpu_custom_call.1} parent=5 // pred_fallthru
        _
    $region6: #{tpu_custom_call.1} parent=1 // loop_footer
      %s21 = sadd.s32 1, %s17
    $region7: #{tpu_custom_call.1} parent=1 // loop_footer_branch
      %16 = sbr.rel target = $region3
    $region8: #{tpu_custom_call.1} parent=1 // loop_exit
      _
    %322 = vsyncpa [#allocation3], 1
    %s323 = scalar_lea.sflag [#allocation3], 1
    %324 = vsyncpa %s323, 1
    %325 = vsyncpa [#allocation6], 1
    %s326 = scalar_lea.sflag [#allocation6], 1
    %327 = vsyncpa %s326, 1
    %328 = vsyncpa [#allocation4], 1
    %s329 = scalar_lea.sflag [#allocation4], 1
    %330 = vsyncpa %s329, 1

</llo_original>
